<compile_context>
chip_gen: v5e
topology: v5e:2x2
jax: 0.10.0
libtpu: 0.0.40
codegen_flags: <defaults>
</compile_context>

<pallas_src>
import jax
import jax.numpy as jnp
from jax.experimental import pallas as pl
from jax.experimental.pallas import tpu as pltpu


def _logreg_kernel(x_ref, w_ref, b_ref, o_ref):
    x = x_ref[...]                       # (TB, D)  native dtype (f32 / bf16)
    w = w_ref[...]                       # (1, D)   same dtype as x, VMEM-resident
    # (1, D) @ (D, TB) -> (1, TB): lane-dense result, f32 accumulation on MXU.
    y = jnp.dot(w, x.T, preferred_element_type=jnp.float32)
    # f32 epilogue (bias add from SMEM scalar), then cast to output dtype.
    o_ref[...] = (y + b_ref[0]).astype(o_ref.dtype)


def logistic_regression_forward(x, weight, bias, *, tb_max=1024):
    """Forward pass of nn.Linear(input_dim, 1).

    x:      (B, D)  float array (streamed as-is, no wrapper dtype cast)
    weight: (1, D)  like nn.Linear.weight
    bias:   (1,)    like nn.Linear.bias
    returns (B, 1)  in x.dtype
    """
    B, D = x.shape
    itemsize = jnp.dtype(x.dtype).itemsize

    # ---- pick the batch tile TB -----------------------------------------
    # Keep 2 (double-buffered) x tiles within ~8 MiB so the kernel fits the
    # default scoped VMEM on every generation (including v7x's 64 MiB part).
    budget = 8 * 1024 * 1024
    tb_fit = max(128, (budget // (2 * D * itemsize)) // 128 * 128)
    tb_cap = max(128, (min(int(tb_max), int(tb_fit)) // 128) * 128)

    if B <= tb_cap:
        tb = B                       # single tile: block == full array is legal
        b_pad = B
    else:
        tb = tb_cap                  # multiple of 128 -> lane/sublane aligned
        b_pad = pl.cdiv(B, tb) * tb
        if b_pad != B:
            # TODO(synk): could rely on Pallas ragged-edge handling instead of
            # this (rarely hit) zero-pad copy of x.
            x = jnp.pad(x, ((0, b_pad - B), (0, 0)))
    num_tiles = b_pad // tb

    w = weight.reshape(1, D).astype(x.dtype)     # tiny; cast is free
    b = bias.reshape(1).astype(jnp.float32)      # SMEM scalar

    out_dtype = x.dtype
    cost = pl.CostEstimate(
        flops=2 * b_pad * D,
        transcendentals=0,
        bytes_accessed=b_pad * D * itemsize
        + D * itemsize
        + b_pad * jnp.dtype(out_dtype).itemsize,
    )

    out = pl.pallas_call(
        _logreg_kernel,
        out_shape=jax.ShapeDtypeStruct((1, b_pad), out_dtype),
        grid_spec=pltpu.PrefetchScalarGridSpec(
            num_scalar_prefetch=0,
            grid=(num_tiles,),
            in_specs=[
                pl.BlockSpec((tb, D), lambda i: (i, 0)),              # streamed x
                pl.BlockSpec((1, D), lambda i: (0, 0)),               # resident W
                pl.BlockSpec(memory_space=pltpu.MemorySpace.SMEM),    # bias scalar
            ],
            out_specs=pl.BlockSpec((1, tb), lambda i: (0, i)),        # lane-dense
        ),
        compiler_params=pltpu.CompilerParams(
            dimension_semantics=("parallel",),   # rows independent; 2 TCs on v7x
            vmem_limit_bytes=32 * 1024 * 1024,   # safe on v5e/v6e/v7x; TB fits under it
        ),
        cost_estimate=cost,
    )(x, w, b)

    return out[0, :B].reshape(B, 1)


if __name__ == "__main__":
    key = jax.random.PRNGKey(0)
    kx1, kx2, kw, kb = jax.random.split(key, 4)

    input_dim = 32
    bound = 1.0 / jnp.sqrt(jnp.float32(input_dim))
    weight = jax.random.uniform(kw, (1, input_dim), minval=-bound, maxval=bound,
                                dtype=jnp.float32)
    bias = jax.random.uniform(kb, (1,), minval=-bound, maxval=bound,
                              dtype=jnp.float32)

    # Case 1: batch tiled into 3 pipelined blocks of 128 rows.
    b1 = 384
    x1 = jax.random.normal(kx1, (b1, input_dim), dtype=jnp.float32)
    out1 = jax.block_until_ready(
        logistic_regression_forward(x1, weight, bias, tb_max=128))
    ref1 = x1 @ weight.T + bias
    assert out1.shape == (b1, 1)
    assert jnp.allclose(out1, ref1, atol=1e-4, rtol=1e-4)

    # Case 2: ragged batch (padded internally to 2 tiles, sliced back).
    b2 = 200
    x2 = jax.random.normal(kx2, (b2, input_dim), dtype=jnp.float32)
    out2 = jax.block_until_ready(
        logistic_regression_forward(x2, weight, bias, tb_max=128))
    ref2 = x2 @ weight.T + bias
    assert out2.shape == (b2, 1)
    assert jnp.allclose(out2, ref2, atol=1e-4, rtol=1e-4)

    print("KERNEL_OK")
</pallas_src>

<mosaic_0001>
module attributes {stable_mosaic.version = 11 : i64} {
  func.func @_logreg_kernel(%arg0: i32, %arg1: memref<128x32xf32, #tpu.memory_space<vmem>>, %arg2: memref<1x32xf32, #tpu.memory_space<vmem>>, %arg3: memref<1xf32, #tpu.memory_space<smem>>, %arg4: memref<1x128xf32, #tpu.memory_space<vmem>>) attributes {dimension_semantics = [#tpu.dimension_semantics<parallel>], iteration_bounds = array<i64: 3>, scalar_prefetch = 0 : i64, scratch_operands = 0 : i64, tpu.core_type = #tpu.core_type<tc>, window_params = [{transform_indices = @transform_0, window_bounds = array<i64: 128, 32>}, {pipeline_mode = #tpu.pipeline_mode<synchronous>, transform_indices = @transform_1, window_bounds = array<i64: 1, 32>}, {transform_indices = @transform_2, window_bounds = array<i64: 1>}, {transform_indices = @transform_3, window_bounds = array<i64: 1, 128>}]} {
    %c0 = arith.constant 0 : index
    %c0_0 = arith.constant 0 : index
    %0 = vector.load %arg1[%c0, %c0_0] : memref<128x32xf32, #tpu.memory_space<vmem>>, vector<128x32xf32>
    %c0_1 = arith.constant 0 : index
    %c0_2 = arith.constant 0 : index
    %1 = vector.load %arg2[%c0_1, %c0_2] : memref<1x32xf32, #tpu.memory_space<vmem>>, vector<1x32xf32>
    %2 = tpu.transpose %0, [1, 0] : vector<128x32xf32> -> vector<32x128xf32>
    %cst = arith.constant dense<0.000000e+00> : vector<1x128xf32>
    %3 = tpu.matmul %1, %2, %cst {dimension_numbers = #tpu.dot_dimension_numbers<[1], [0], [0], [1], [0, 0, 1, 1], [], []>} : vector<1x32xf32>, vector<32x128xf32>, vector<1x128xf32> -> vector<1x128xf32>
    %c0_3 = arith.constant 0 : index
    %4 = memref.load %arg3[%c0_3] : memref<1xf32, #tpu.memory_space<smem>>
    %5 = vector.broadcast %4 : f32 to vector<1x128xf32>
    %6 = arith.addf %3, %5 : vector<1x128xf32>
    %c0_4 = arith.constant 0 : index
    %c0_5 = arith.constant 0 : index
    %7 = vector.load %arg4[%c0_4, %c0_5] : memref<1x128xf32, #tpu.memory_space<vmem>>, vector<1x128xf32>
    tpu.vector_store %arg4[%c0_4, %c0_5], %6 {strides = array<i32>} : memref<1x128xf32, #tpu.memory_space<vmem>>, vector<1x128xf32>,
    return
  }
  func.func @transform_0(%arg0: i32) -> (i32, i32) {
    %c0_i32 = arith.constant 0 : i32
    %c0_i32_0 = arith.constant 0 : i32
    return %arg0, %c0_i32 : i32, i32
  }
  func.func @transform_1(%arg0: i32) -> (i32, i32) {
    %c0_i32 = arith.constant 0 : i32
    %c0_i32_0 = arith.constant 0 : i32
    %c0_i32_1 = arith.constant 0 : i32
    return %c0_i32, %c0_i32_0 : i32, i32
  }
  func.func @transform_2(%arg0: i32) -> i32 {
    %c0_i32 = arith.constant 0 : i32
    %c0_i32_0 = arith.constant 0 : i32
    return %c0_i32 : i32
  }
  func.func @transform_3(%arg0: i32) -> (i32, i32) {
    %c0_i32 = arith.constant 0 : i32
    %c0_i32_0 = arith.constant 0 : i32
    return %c0_i32, %arg0 : i32, i32
  }
}

</mosaic_0001>

<llo_original>
// kernel: tpu_custom_call.1
$region0: #{tpu_custom_call.1}
  #allocation0 [shape = 'u32[]', space=smem, size = 0x4, offset = 0x4, fixed_abs, tag = 'smem constant byte address 0x4 - core index']
  #allocation1 [shape = 'u32[72,128]{1,0:T(1,128)}', space=vmem, size = 0x9000, scoped, tag = 'internal scratch']
  #allocation2 [shape = 'f32[1]{0:T(128)S(6)}', space=smem, size = 0x200, scoped, tag = 'scoped memory for tpu_custom_call.1']
  %s0 = inlined_call_operand.vmem [shape: f32[384,32], index: 0, kind: input, shape index: {}]
  %s1 = inlined_call_operand.vmem [shape: f32[1,32], index: 1, kind: input, shape index: {}]
  %s2 = inlined_call_operand.<no memory space> [shape: f32[1], index: 2, kind: input, shape index: {}]
  %s3 = inlined_call_operand.hbm [shape: f32[1,384], index: 3, kind: output, shape index: {}]
  %s4 = sld [smem:[#allocation0]]
  $region45: #{tpu_custom_call.1} parent=0
    _
  %s6 = ssub.s32 1, %s4
  %s7 = scalar_select 0, %s6, %s4
  %8 = sst [smem:[#allocation2]] %s2
  $region1: #{tpu_custom_call.1} parent=0
    #allocation3 [shape = 'u8[1024]{0}', space=vmem, size = 0x400, scoped, tag = 'output window, operand 0']
    #allocation4 [shape = 's32[2]{0}', space=sflag, size = 0x8, scoped, tag = 'scoped memory for tpu_custom_call.1']
    %9 = vsyncpa [#allocation4], 0
    %s10 = scalar_lea.sflag [#allocation4], 1
    %11 = vsyncpa %s10, 0
    loop: start=0, step=1, limit=5
    $region2: #{tpu_custom_call.1} parent=1 // loop_pre_header
      _
    $region3: #{tpu_custom_call.1} parent=1 // loop_header
      %s13 = sphi 0, %s17
      %p14 = scmp.ge.s32.totalorder %s13, 5
      %s23 = sphi 0, %s25
      %s26 = sphi 0, %s23
      %s27 = sphi 0, %s26
      %s43 = sphi 0, %s27
      %s47 = sphi 0, %s47
      %s49 = sphi 0, %s47
      %s50 = sphi 0, %s49
      %s64 = sphi 0, %s50
      %s68 = sphi 0, %s68
      %s70 = sphi 0, %s68
      %s71 = sphi 0, %s70
      %s85 = sphi 0, %s71
      %s91 = sphi 0, %s93
      %s94 = sphi 0, %s91
      %s95 = sphi 0, %s94
      %s111 = sphi 0, %s95
    $region4: #{tpu_custom_call.1} parent=1 // loop_header_branch
      %16 = sbr.rel (%p14) target = $region8
    $region5: #{tpu_custom_call.1} parent=1 // loop_body
      %s18 = ssub.s32 %s13, 1
      %s19 = ssub.s32 %s13, 2
      %s20 = sadd.s32 %s13, 1
      %s21 = ssub.s32 %s13, %s20
      %p22 = scmp.eq.s32.totalorder %s21, 0
      %s24 = sadd.s32 %s23, 1
      %s25 = scalar_select %p22, %s23, %s24
      %p28 = pneg %p22
      %p29 = scmp.eq.s32.totalorder %s13, 2
      %p30 = por %p28, %p29
      %p31 = scmp.ne.s32.totalorder %s23, %s26
      %p32 = scmp.eq.s32.totalorder %s13, 0
      %p33 = por %p31, %p32
      %p34 = scmp.ne.s32.totalorder %s23, %s26
      %p35 = scmp.eq.s32.totalorder %s18, 2
      %p36 = por %p34, %p35
      %p37 = scmp.ne.s32.totalorder %s26, %s27
      %p38 = scmp.eq.s32.totalorder %s18, 0
      %p39 = por %p37, %p38
      %p40 = scmp.ne.s32.totalorder %s26, %s27
      %p41 = scmp.eq.s32.totalorder %s19, 2
      %p42 = por %p40, %p41
      %p44 = scmp.ne.s32.totalorder %s27, %s43
      %p45 = scmp.eq.s32.totalorder %s19, 0
      %p46 = por %p44, %p45
      %s48 = sadd.s32 %s47, 1
      %p51 = scmp.eq.s32.totalorder %s13, 2
      %p52 = scmp.ne.s32.totalorder %s47, %s49
      %p53 = scmp.eq.s32.totalorder %s13, 0
      %p54 = por %p52, %p53
      %p55 = scmp.ne.s32.totalorder %s47, %s49
      %p56 = scmp.eq.s32.totalorder %s18, 2
      %p57 = por %p55, %p56
      %p58 = scmp.ne.s32.totalorder %s49, %s50
      %p59 = scmp.eq.s32.totalorder %s18, 0
      %p60 = por %p58, %p59
      %p61 = scmp.ne.s32.totalorder %s49, %s50
      %p62 = scmp.eq.s32.totalorder %s19, 2
      %p63 = por %p61, %p62
      %p65 = scmp.ne.s32.totalorder %s50, %s64
      %p66 = scmp.eq.s32.totalorder %s19, 0
      %p67 = por %p65, %p66
      %s69 = sadd.s32 %s68, 1
      %p72 = scmp.eq.s32.totalorder %s13, 2
      %p73 = scmp.ne.s32.totalorder %s68, %s70
      %p74 = scmp.eq.s32.totalorder %s13, 0
      %p75 = por %p73, %p74
      %p76 = scmp.ne.s32.totalorder %s68, %s70
      %p77 = scmp.eq.s32.totalorder %s18, 2
      %p78 = por %p76, %p77
      %p79 = scmp.ne.s32.totalorder %s70, %s71
      %p80 = scmp.eq.s32.totalorder %s18, 0
      %p81 = por %p79, %p80
      %p82 = scmp.ne.s32.totalorder %s70, %s71
      %p83 = scmp.eq.s32.totalorder %s19, 2
      %p84 = por %p82, %p83
      %p86 = scmp.ne.s32.totalorder %s71, %s85
      %p87 = scmp.eq.s32.totalorder %s19, 0
      %p88 = por %p86, %p87
      %s89 = ssub.s32 %s13, %s20
      %p90 = scmp.eq.s32.totalorder %s89, 0
      %s92 = sadd.s32 %s91, 1
      %s93 = scalar_select %p90, %s91, %s92
      %p96 = pneg %p90
      %p97 = scmp.eq.s32.totalorder %s13, 2
      %p98 = por %p96, %p97
      %p99 = scmp.ne.s32.totalorder %s91, %s94
      %p100 = scmp.eq.s32.totalorder %s13, 0
      %p101 = por %p99, %p100
      %p102 = scmp.ne.s32.totalorder %s91, %s94
      %p103 = scmp.eq.s32.totalorder %s18, 2
      %p104 = por %p102, %p103
      %p105 = scmp.ne.s32.totalorder %s94, %s95
      %p106 = scmp.eq.s32.totalorder %s18, 0
      %p107 = por %p105, %p106
      %p108 = scmp.ne.s32.totalorder %s94, %s95
      %p109 = scmp.eq.s32.totalorder %s19, 2
      %p110 = por %p108, %p109
      %p112 = scmp.ne.s32.totalorder %s95, %s111
      %p113 = scmp.eq.s32.totalorder %s19, 0
      %p114 = por %p112, %p113
      %p115 = scmp.le.s32.totalorder 1, %s13
      %p116 = scmp.lt.s32.totalorder %s13, 4
      %p117 = pnand %p115, %p116
      %p118 = pneg %p117
      // Predicated region
      $region9: #{tpu_custom_call.1} parent=5 // pred_check
        _
      $region10: #{tpu_custom_call.1} parent=5 // pred_check_branch
        %120 = sbr.rel (%p117) target = $region12
      $region11: #{tpu_custom_call.1} parent=5 // pred_region
        %s121 = ssub.s32 %s13, 1
        // Predicated region
        $region13: #{tpu_custom_call.1} parent=11 // pred_check
          %p122 = pneg %p60
        $region14: #{tpu_custom_call.1} parent=11 // pred_check_branch
          %124 = sbr.rel (%p122) target = $region16
        $region15: #{tpu_custom_call.1} parent=11 // pred_region
          _
        $region16: #{tpu_custom_call.1} parent=11 // pred_fallthru
          _
        // Predicated region
        $region17: #{tpu_custom_call.1} parent=11 // pred_check
          %p125 = pneg %p81
        $region18: #{tpu_custom_call.1} parent=11 // pred_check_branch
          %127 = sbr.rel (%p125) target = $region20
        $region19: #{tpu_custom_call.1} parent=11 // pred_region
          _
        $region20: #{tpu_custom_call.1} parent=11 // pred_fallthru
          _
      $region12: #{tpu_custom_call.1} parent=5 // pred_fallthru
        _
      %p128 = scmp.lt.s32.totalorder %s13, 3
      // Predicated region
      $region21: #{tpu_custom_call.1} parent=5 // pred_check
        %p129 = pneg %p128
      $region22: #{tpu_custom_call.1} parent=5 // pred_check_branch
        %131 = sbr.rel (%p129) target = $region24
      $region23: #{tpu_custom_call.1} parent=5 // pred_region
        // Predicated region
        $region25: #{tpu_custom_call.1} parent=23 // pred_check
          %p132 = pneg %p33
        $region26: #{tpu_custom_call.1} parent=23 // pred_check_branch
          %134 = sbr.rel (%p132) target = $region28
        $region27: #{tpu_custom_call.1} parent=23 // pred_region
          %s135 = smul.u32 16, %s13
          %p136 = scmp.lt.s32.totalorder %s135, 47
          %s137 = scalar_select %p136, %s135, 47
          %s138 = smul.addr %s137, 8
          %s139 = scalar_lea.vmem %s0, %s138
          %s140 = smul.u32 16, %s13
        $region28: #{tpu_custom_call.1} parent=23 // pred_fallthru
          _
      $region24: #{tpu_custom_call.1} parent=5 // pred_fallthru
        _
      %p141 = scmp.le.s32.totalorder 1, %s13
      %p142 = scmp.lt.s32.totalorder %s13, 4
      %p143 = pnand %p141, %p142
      %p144 = pneg %p143
      // Predicated region
      $region29: #{tpu_custom_call.1} parent=5 // pred_check
        _
      $region30: #{tpu_custom_call.1} parent=5 // pred_check_branch
        %146 = sbr.rel (%p143) target = $region32
      $region31: #{tpu_custom_call.1} parent=5 // pred_region
        %s147 = ssub.s32 %s13, 1
        %s148 = smul.u32 16, %s18
        %p149 = scmp.lt.s32.totalorder %s148, 47
        %s150 = scalar_select %p149, %s148, 47
        %s151 = smul.addr %s150, 8
        %s152 = scalar_lea.vmem %s0, %s151
        %p153 = pneg %p39
        %p154 = pneg %p36
        %p155 = pneg %p60
        %p156 = pneg %p57
        %p157 = pneg %p81
        %p158 = pneg %p78
        %p159 = pneg %p107
        %p160 = pneg %p104
        %s161 = sand.u32 %s94, 1
        %s162 = scalar_lea.sflag [#allocation4], %s161
        %s163 = sand.u32 %s94, 1
        %s164 = scalar_lea.vmem [#allocation3], %s163
        %s165 = smul.u32 16, %s18
        %p166 = scmp.lt.s32.totalorder %s165, 47
        %s167 = scalar_select %p166, %s165, 47
        %s168 = smul.addr %s167, 8
        %s169 = scalar_lea.vmem %s0, %s168
        %s170 = smul.u32 16, %s18
        %v171 = vld [vmem:[%s169] sm:$0xff]
        %v172 = vld [vmem:[%s169 + $0x8] sm:$0xff]
        %v173 = vld [vmem:[%s169 + $0x10] sm:$0xff]
        %v174 = vld [vmem:[%s169 + $0x18] sm:$0xff]
        %v175 = vld [vmem:[%s169 + $0x20] sm:$0xff]
        %v176 = vld [vmem:[%s169 + $0x28] sm:$0xff]
        %v177 = vld [vmem:[%s169 + $0x30] sm:$0xff]
        %v178 = vld [vmem:[%s169 + $0x38] sm:$0xff]
        %v179 = vld [vmem:[%s169 + $0x40] sm:$0xff]
        %v180 = vld [vmem:[%s169 + $0x48] sm:$0xff]
        %v181 = vld [vmem:[%s169 + $0x50] sm:$0xff]
        %v182 = vld [vmem:[%s169 + $0x58] sm:$0xff]
        %v183 = vld [vmem:[%s169 + $0x60] sm:$0xff]
        %v184 = vld [vmem:[%s169 + $0x68] sm:$0xff]
        %v185 = vld [vmem:[%s169 + $0x70] sm:$0xff]
        %v186 = vld [vmem:[%s169 + $0x78] sm:$0xff]
        %v187 = vld [vmem:[%s1] sm:$0x1]
        %s188 = sld [smem:[#allocation2]]
        %v189 = vstv %s188
        %vm190 = vcmask 261120
        %v192 = vsel %vm190, %v187, 0
        %v195 = vsel %vm190, %v171, 0
        %v198 = vsel %vm190, %v172, 0
        %v201 = vsel %vm190, %v173, 0
        %v204 = vsel %vm190, %v174, 0
        %v207 = vsel %vm190, %v175, 0
        %v210 = vsel %vm190, %v176, 0
        %v213 = vsel %vm190, %v177, 0
        %v216 = vsel %vm190, %v178, 0
        %v219 = vsel %vm190, %v179, 0
        %v222 = vsel %vm190, %v180, 0
        %v225 = vsel %vm190, %v181, 0
        %v228 = vsel %vm190, %v182, 0
        %v231 = vsel %vm190, %v183, 0
        %v234 = vsel %vm190, %v184, 0
        %v237 = vsel %vm190, %v185, 0
        %v240 = vsel %vm190, %v186, 0
        %242 = vmatpush.xpose.msra.mxu0 %v240
        %243 = vmatpush.xpose.msra.mxu0 %v237
        %244 = vmatpush.xpose.msra.mxu0 %v234
        %245 = vmatpush.xpose.msra.mxu0 %v231
        %246 = vmatpush.xpose.msra.mxu0 %v228
        %247 = vmatpush.xpose.msra.mxu0 %v225
        %248 = vmatpush.xpose.msra.mxu0 %v222
        %249 = vmatpush.xpose.msra.mxu0 %v219
        %250 = vmatpush.xpose.msra.mxu0 %v216
        %251 = vmatpush.xpose.msra.mxu0 %v213
        %252 = vmatpush.xpose.msra.mxu0 %v210
        %253 = vmatpush.xpose.msra.mxu0 %v207
        %254 = vmatpush.xpose.msra.mxu0 %v204
        %255 = vmatpush.xpose.msra.mxu0 %v201
        %256 = vmatpush.xpose.msra.mxu0 %v198
        %257 = vmatpush.xpose.msra.mxu0 %v195
        %258 = vmatmul.f32.gmra.mxu0 %v192
        %v259 = vpop.f32.mrf.mxu0
        %v260 = vadd.f32 %v189, %v259
        %261 = vdwg.mxu0
        %262 = vst [vmem:[%s164] sm:$0x1] %v260
        %s263 = sand.u32 %s94, 1
        %s264 = scalar_lea.sflag [#allocation4], %s263
        %s265 = sand.u32 %s94, 1
        %s266 = scalar_lea.vmem [#allocation3], %s265
        // Predicated region
        $region33: #{tpu_custom_call.1} parent=31 // pred_check
          %p267 = pneg %p104
        $region34: #{tpu_custom_call.1} parent=31 // pred_check_branch
          %269 = sbr.rel (%p267) target = $region36
        $region35: #{tpu_custom_call.1} parent=31 // pred_region
          %271 = vsyncadd %s264, 0
          %s272 = scalar_lea.hbm %s3, %s18
          %s274 = sshll.u32 %s266, 4
          %s275 = int_to_ptr.vmem [resolvable:$true] %s274
          %s276 = sshll.u32 %s272, 4
          %s277 = int_to_ptr.hbm [resolvable:$true] %s276
          %279 = dma.vmem_to_hbm [thread:$0]  %s275, 16, %s277, %s264
        $region36: #{tpu_custom_call.1} parent=31 // pred_fallthru
          _
      $region32: #{tpu_custom_call.1} parent=5 // pred_fallthru
        _
      %p280 = scmp.le.s32.totalorder 2, %s13
      // Predicated region
      $region37: #{tpu_custom_call.1} parent=5 // pred_check
        %p281 = pneg %p280
      $region38: #{tpu_custom_call.1} parent=5 // pred_check_branch
        %283 = sbr.rel (%p281) target = $region40
      $region39: #{tpu_custom_call.1} parent=5 // pred_region
        %s284 = ssub.s32 %s13, 2
        // Predicated region
        $region41: #{tpu_custom_call.1} parent=39 // pred_check
          %p285 = pneg %p110
        $region42: #{tpu_custom_call.1} parent=39 // pred_check_branch
          %287 = sbr.rel (%p285) target = $region44
        $region43: #{tpu_custom_call.1} parent=39 // pred_region
          %s288 = sand.u32 %s95, 1
          %s289 = scalar_lea.sflag [#allocation4], %s288
          %s290 = sand.u32 %s95, 1
          %s291 = scalar_lea.vmem [#allocation3], %s290
          %293 = dma.done %s289, 16
        $region44: #{tpu_custom_call.1} parent=39 // pred_fallthru
          _
      $region40: #{tpu_custom_call.1} parent=5 // pred_fallthru
        _
    $region6: #{tpu_custom_call.1} parent=1 // loop_footer
      %s17 = sadd.s32 1, %s13
    $region7: #{tpu_custom_call.1} parent=1 // loop_footer_branch
      %12 = sbr.rel target = $region3
    $region8: #{tpu_custom_call.1} parent=1 // loop_exit
      _
    %294 = vsyncpa [#allocation4], 1
    %s295 = scalar_lea.sflag [#allocation4], 1
    %296 = vsyncpa %s295, 1

</llo_original>
